<compile_context>
chip_gen: v7x
topology: tpu7x:2x2x1
jax: 0.10.0
libtpu: 0.0.40
codegen_flags: <defaults>
</compile_context>

<pallas_src>
import jax
import jax.numpy as jnp
from jax.experimental import pallas as pl
from jax.experimental.pallas import tpu as pltpu

_LANES = 128


# ------------------------------ kernel ------------------------------------- #

def _dsvdd_rowloss_kernel(rep_ref, c_ref, loss_ref):
    # rep_ref : (D, TN)  -- batch on the lane axis
    # c_ref   : (D, 1)   -- lane-broadcast hyper-sphere center (f32)
    # loss_ref: (1, TN)  -- lane-dense per-sample squared distances (f32)
    diff = rep_ref[...].astype(jnp.float32) - c_ref[...]
    loss_ref[...] = jnp.sum(diff * diff, axis=0, keepdims=True)


# ------------------------------ wrapper ------------------------------------ #

def dsvdd_loss(rep, c, reduction="mean", *, tn=None,
               vmem_limit_bytes=32 * 1024 * 1024):
    """Pallas implementation of DSVDDLoss.forward.

    rep: (N, D) float, c: (D,) float.
    """
    N, D = rep.shape
    assert c.shape == (D,)
    itemsize = jnp.dtype(rep.dtype).itemsize

    # --- tile selection: ~4 MiB of `rep` per grid step, lanes multiple of 128.
    # TODO(synk): for extremely large rep_dim (D*128*4 bytes > VMEM budget) a
    # second grid axis over D would be needed; DSVDD rep_dim is small so the
    # single-axis grid is kept.
    if tn is None:
        target_bytes = 4 * 1024 * 1024
        tn = max(_LANES, (target_bytes // (D * itemsize)) // _LANES * _LANES)
    # never pad the batch beyond one lane-aligned tile for tiny N
    tn = min(tn, pl.cdiv(N, _LANES) * _LANES)
    tn = max(_LANES, (tn // _LANES) * _LANES)
    grid = (pl.cdiv(N, tn),)
    n_pad = grid[0] * tn

    # --- layout plumbing (wrapper side): batch-on-lanes + pad to a tile
    # multiple. Padded columns produce garbage losses but are sliced off
    # below, so no in-kernel masking is needed.
    rep_t = jnp.pad(rep, ((0, n_pad - N), (0, 0))).T           # (D, n_pad)
    c2 = jnp.asarray(c, dtype=jnp.float32).reshape(D, 1)       # (D, 1)

    per_sample_pad = pl.pallas_call(
        _dsvdd_rowloss_kernel,
        out_shape=jax.ShapeDtypeStruct((1, n_pad), jnp.float32),
        grid_spec=pltpu.PrefetchScalarGridSpec(
            num_scalar_prefetch=0,
            grid=grid,
            in_specs=[
                pl.BlockSpec((D, tn), lambda i: (0, i)),
                # NOTE: constant index_map re-DMAs c every step; that is D*4
                # bytes vs D*tn*itemsize of rep per step -> negligible traffic.
                pl.BlockSpec((D, 1), lambda i: (0, 0)),
            ],
            out_specs=pl.BlockSpec((1, tn), lambda i: (0, i)),
        ),
        compiler_params=pltpu.CompilerParams(
            dimension_semantics=("parallel",),
            vmem_limit_bytes=vmem_limit_bytes,
        ),
    )(rep_t, c2)

    per_sample = per_sample_pad[0, :N]                          # (N,) f32
    if reduction == "none":
        return per_sample.astype(rep.dtype)
    if reduction == "mean":
        return jnp.mean(per_sample).astype(rep.dtype)
    if reduction == "sum":
        return jnp.sum(per_sample).astype(rep.dtype)
    raise ValueError(f"unknown reduction: {reduction}")


# -------------------------------- main -------------------------------------- #

if __name__ == "__main__":
    key = jax.random.PRNGKey(0)
    k_rep, k_c, k_rep2 = jax.random.split(key, 3)

    # small shapes consistent with the module: batch=8, rep_dim=32
    N, D = 8, 32
    rep = jax.random.normal(k_rep, (N, D), dtype=jnp.float32)
    # deterministic synthetic hyper-sphere center (module's `c` parameter)
    c = jax.random.normal(k_c, (D,), dtype=jnp.float32)

    # pure-JAX reference
    ref_vec = jnp.sum((rep - c[None, :]) ** 2, axis=1)

    out_mean = jax.block_until_ready(dsvdd_loss(rep, c, "mean"))
    out_sum = jax.block_until_ready(dsvdd_loss(rep, c, "sum"))
    out_none = jax.block_until_ready(dsvdd_loss(rep, c, "none"))

    assert jnp.allclose(out_mean, jnp.mean(ref_vec), rtol=1e-5, atol=1e-5)
    assert jnp.allclose(out_sum, jnp.sum(ref_vec), rtol=1e-5, atol=1e-5)
    assert jnp.allclose(out_none, ref_vec, rtol=1e-5, atol=1e-5)

    # second check: batch not a multiple of the (forced small) tile, exercising
    # a multi-step parallel grid plus tail padding.
    N2 = 200
    rep2 = jax.random.normal(k_rep2, (N2, D), dtype=jnp.float32)
    ref_vec2 = jnp.sum((rep2 - c[None, :]) ** 2, axis=1)
    out2_sum = jax.block_until_ready(dsvdd_loss(rep2, c, "sum", tn=128))
    out2_none = jax.block_until_ready(dsvdd_loss(rep2, c, "none", tn=128))
    assert jnp.allclose(out2_sum, jnp.sum(ref_vec2), rtol=1e-5, atol=1e-5)
    assert jnp.allclose(out2_none, ref_vec2, rtol=1e-5, atol=1e-5)

    print("KERNEL_OK")
</pallas_src>

<mosaic_0001>
module attributes {stable_mosaic.version = 11 : i64} {
  func.func @_dsvdd_rowloss_kernel(%arg0: i32, %arg1: memref<32x128xf32, #tpu.memory_space<vmem>>, %arg2: memref<32x1xf32, #tpu.memory_space<vmem>>, %arg3: memref<1x128xf32, #tpu.memory_space<vmem>>) attributes {dimension_semantics = [#tpu.dimension_semantics<parallel>], iteration_bounds = array<i64: 1>, scalar_prefetch = 0 : i64, scratch_operands = 0 : i64, tpu.core_type = #tpu.core_type<tc>, window_params = [{transform_indices = @transform_0, window_bounds = array<i64: 32, 128>}, {pipeline_mode = #tpu.pipeline_mode<synchronous>, transform_indices = @transform_1, window_bounds = array<i64: 32, 1>}, {transform_indices = @transform_2, window_bounds = array<i64: 1, 128>}]} {
    %c0 = arith.constant 0 : index
    %c0_0 = arith.constant 0 : index
    %0 = vector.load %arg1[%c0, %c0_0] : memref<32x128xf32, #tpu.memory_space<vmem>>, vector<32x128xf32>
    %c0_1 = arith.constant 0 : index
    %c0_2 = arith.constant 0 : index
    %1 = vector.load %arg2[%c0_1, %c0_2] : memref<32x1xf32, #tpu.memory_space<vmem>>, vector<32x1xf32>
    %2 = vector.broadcast %1 : vector<32x1xf32> to vector<32x128xf32>
    %3 = arith.subf %0, %2 : vector<32x128xf32>
    %4 = arith.mulf %3, %3 : vector<32x128xf32>
    %cst = arith.constant dense<0.000000e+00> : vector<128xf32>
    %5 = vector.multi_reduction <add>, %4, %cst [0] : vector<32x128xf32> to vector<128xf32>
    %6 = vector.shape_cast %5 : vector<128xf32> to vector<1x128xf32>
    %c0_3 = arith.constant 0 : index
    %c0_4 = arith.constant 0 : index
    %7 = vector.load %arg3[%c0_3, %c0_4] : memref<1x128xf32, #tpu.memory_space<vmem>>, vector<1x128xf32>
    tpu.vector_store %arg3[%c0_3, %c0_4], %6 {strides = array<i32>} : memref<1x128xf32, #tpu.memory_space<vmem>>, vector<1x128xf32>,
    return
  }
  func.func @transform_0(%arg0: i32) -> (i32, i32) {
    %c0_i32 = arith.constant 0 : i32
    %c0_i32_0 = arith.constant 0 : i32
    return %c0_i32, %arg0 : i32, i32
  }
  func.func @transform_1(%arg0: i32) -> (i32, i32) {
    %c0_i32 = arith.constant 0 : i32
    %c0_i32_0 = arith.constant 0 : i32
    %c0_i32_1 = arith.constant 0 : i32
    return %c0_i32, %c0_i32_0 : i32, i32
  }
  func.func @transform_2(%arg0: i32) -> (i32, i32) {
    %c0_i32 = arith.constant 0 : i32
    %c0_i32_0 = arith.constant 0 : i32
    return %c0_i32, %arg0 : i32, i32
  }
}

</mosaic_0001>

<llo_original>
// kernel: tpu_custom_call.1
$region0: #{tpu_custom_call.1}
  #allocation0 [shape = 'u32[]', space=smem, size = 0x4, offset = 0x4, fixed_abs, tag = 'smem constant byte address 0x4 - core index']
  #allocation1 [shape = 'u32[144,128]{1,0:T(1,128)}', space=vmem, size = 0x12000, scoped, tag = 'internal scratch']
  %s0 = inlined_call_operand.vmem [shape: f32[32,128], index: 0, kind: input, shape index: {}]
  %s1 = inlined_call_operand.vmem [shape: f32[32,1], index: 1, kind: input, shape index: {}]
  %s2 = inlined_call_operand.hbm [shape: f32[1,128], index: 2, kind: output, shape index: {}]
  %s3 = sld [smem:[#allocation0]]
  $region18: #{tpu_custom_call.1} parent=0
    _
  %s5 = ssub.s32 1, %s3
  %s6 = scalar_select 0, %s5, %s3
  $region1: #{tpu_custom_call.1} parent=0
    #allocation2 [shape = 'u8[512]{0}', space=vmem, size = 0x400, scoped, tag = 'output window, operand 0, single buffered']
    #allocation3 [shape = 's32[1]{0}', space=sflag, size = 0x4, scoped, tag = 'scoped memory for tpu_custom_call.1']
    %7 = vsyncpa [#allocation3], 0
    // Predicated region
    $region2: #{tpu_custom_call.1} parent=1 // pred_check
      _
    $region3: #{tpu_custom_call.1} parent=1 // pred_check_branch
      %9 = sbr.rel (0) target = $region5
    $region4: #{tpu_custom_call.1} parent=1 // pred_region
      _
    $region5: #{tpu_custom_call.1} parent=1 // pred_fallthru
      _
    // Predicated region
    $region6: #{tpu_custom_call.1} parent=1 // pred_check
      _
    $region7: #{tpu_custom_call.1} parent=1 // pred_check_branch
      %11 = sbr.rel (0) target = $region9
    $region8: #{tpu_custom_call.1} parent=1 // pred_region
      _
    $region9: #{tpu_custom_call.1} parent=1 // pred_fallthru
      _
    %v12 = vld [vmem:[%s0] sm:$0xff]
    %v13 = vld [vmem:[%s0 + $0x8] sm:$0xff]
    %v14 = vld [vmem:[%s0 + $0x10] sm:$0xff]
    %v15 = vld [vmem:[%s0 + $0x18] sm:$0xff]
    %v16 = vld [vmem:[%s1] sm:$0xff]
    %v17 = vld [vmem:[%s1 + $0x8] sm:$0xff]
    %v18 = vld [vmem:[%s1 + $0x10] sm:$0xff]
    %v19 = vld [vmem:[%s1 + $0x18] sm:$0xff]
    %21 = vset.pattern.permute.xlu0 0
    %22 = vperm.xlu0 %21, %v16
    %v23 = vpop.permute.xlu0 %22
    %26 = vset.pattern.permute.xlu0 0
    %27 = vperm.xlu0 %26, %v17
    %v28 = vpop.permute.xlu0 %27
    %31 = vset.pattern.permute.xlu0 0
    %32 = vperm.xlu0 %31, %v18
    %v33 = vpop.permute.xlu0 %32
    %36 = vset.pattern.permute.xlu0 0
    %37 = vperm.xlu0 %36, %v19
    %v38 = vpop.permute.xlu0 %37
    %v40 = vsub.f32 %v12, %v23
    %v41 = vsub.f32 %v13, %v28
    %v42 = vsub.f32 %v14, %v33
    %v43 = vsub.f32 %v15, %v38
    %v44 = vmul.f32 %v40, %v40
    %v45 = vmul.f32 %v41, %v41
    %v46 = vmul.f32 %v42, %v42
    %v47 = vmul.f32 %v43, %v43
    %v48 = vadd.f32 %v44, %v45
    %v49 = vadd.f32 %v48, %v46
    %v50 = vadd.f32 %v49, %v47
    %v51 = vrot.slane %v50, 4
    %v52 = vadd.f32 %v50, %v51
    %v53 = vrot.slane %v52, 2
    %v54 = vadd.f32 %v52, %v53
    %v55 = vrot.slane %v54, 1
    %v56 = vadd.f32 %v54, %v55
    %57 = vst [vmem:[#allocation2] sm:$0x1] %v56
    // Predicated region
    $region10: #{tpu_custom_call.1} parent=1 // pred_check
      _
    $region11: #{tpu_custom_call.1} parent=1 // pred_check_branch
      %59 = sbr.rel (0) target = $region13
    $region12: #{tpu_custom_call.1} parent=1 // pred_region
      %s61 = ssub.s32 16, 16
      %62 = vsyncadd [#allocation3], %s61
      %s64 = sshll.u32 [#allocation2], 4
      %s65 = int_to_ptr.vmem [resolvable:$true] %s64
      %67 = dma.vmem_to_hbm [thread:$0]  %s65, 16, %s2, [#allocation3]
    $region13: #{tpu_custom_call.1} parent=1 // pred_fallthru
      _
    // Predicated region
    $region14: #{tpu_custom_call.1} parent=1 // pred_check
      _
    $region15: #{tpu_custom_call.1} parent=1 // pred_check_branch
      %69 = sbr.rel (0) target = $region17
    $region16: #{tpu_custom_call.1} parent=1 // pred_region
      %70 = dma.done [#allocation3], 16
    $region17: #{tpu_custom_call.1} parent=1 // pred_fallthru
      _
    %71 = vsyncpa [#allocation3], 1

</llo_original>
